<compile_context>
chip_gen: v7x
topology: tpu7x:2x2x1
jax: 0.10.0
libtpu: 0.0.40
codegen_flags: <defaults>
</compile_context>

<pallas_src>
import functools

import jax
import jax.numpy as jnp
from jax.experimental import pallas as pl
from jax.experimental.pallas import tpu as pltpu


def _round_up(x, m):
    return (x + m - 1) // m * m


# --------------------------------------------------------------------------
# Kernels
# --------------------------------------------------------------------------
def _head_single_chunk_kernel(xs_ref, xt_ref, ws_ref, wt_ref, b_ref, o_ref):
    """grid = (batch tiles,).  xs/xt blocks: (TB, S, C) channels-last.

    AdaptiveAvgPool3d((1,1,1)) == mean over S = T*H*W.  The 1/S mean and the
    0.5 two-stream average are pre-folded into the weights, so only the raw
    sums are needed here; reducing over the sublane axis keeps the (TB, C)
    pooled result lane-dense for the MXU dots.
    """
    ps = jnp.sum(xs_ref[...].astype(jnp.float32), axis=1)          # (TB, C)
    pt = jnp.sum(xt_ref[...].astype(jnp.float32), axis=1)          # (TB, C)
    logits = (jnp.dot(ps, ws_ref[...], preferred_element_type=jnp.float32)
              + jnp.dot(pt, wt_ref[...], preferred_element_type=jnp.float32)
              + b_ref[...])
    o_ref[...] = logits.astype(o_ref.dtype)


def _head_multi_chunk_kernel(xs_ref, xt_ref, ws_ref, wt_ref, b_ref, o_ref,
                             acc_s, acc_t, *, S, TS, needs_mask):
    """grid = (batch tiles ["parallel"], S chunks ["arbitrary"]).

    Per-batch-tile f32 sum accumulators (P3 init/finalize via pl.when); the
    ragged last chunk is masked only when reached (pl.when-gated).
    """
    k = pl.program_id(1)
    last = pl.num_programs(1) - 1

    @pl.when(k == 0)
    def _init():
        acc_s[...] = jnp.zeros_like(acc_s)
        acc_t[...] = jnp.zeros_like(acc_t)

    xs = xs_ref[...].astype(jnp.float32)
    xt = xt_ref[...].astype(jnp.float32)

    if needs_mask:
        @pl.when(k != last)
        def _plain():
            acc_s[...] += jnp.sum(xs, axis=1)
            acc_t[...] += jnp.sum(xt, axis=1)

        @pl.when(k == last)
        def _masked():
            # Only the last chunk pays for the mask; iota over the sublane axis.
            sub = jax.lax.broadcasted_iota(jnp.int32, xs.shape, dimension=1)
            m = sub < (S - k * TS)
            acc_s[...] += jnp.sum(jnp.where(m, xs, 0.0), axis=1)
            acc_t[...] += jnp.sum(jnp.where(m, xt, 0.0), axis=1)
    else:
        acc_s[...] += jnp.sum(xs, axis=1)
        acc_t[...] += jnp.sum(xt, axis=1)

    @pl.when(k == last)
    def _finalize():
        logits = (jnp.dot(acc_s[...], ws_ref[...],
                          preferred_element_type=jnp.float32)
                  + jnp.dot(acc_t[...], wt_ref[...],
                            preferred_element_type=jnp.float32)
                  + b_ref[...])
        o_ref[...] = logits.astype(o_ref.dtype)


# --------------------------------------------------------------------------
# Tile planning
# --------------------------------------------------------------------------
def _plan_tiles(B, S, C, N, itemsize, feat_budget, small_vmem, s_chunk_cap):
    """Pick (TB, TS) so the double-buffered working set fits `feat_budget`."""
    lane = 128
    sub = max(8, 32 // itemsize)            # sublane packing: f32=8 bf16=16 i8=32
    C_pad = _round_up(C, lane)
    N_pad = _round_up(N, lane)

    # Constant operands (two weights + bias, double-buffered by the pipeline)
    # plus output-block padding slack.
    fixed = 2 * 2 * _round_up(C, 8) * N_pad * 4 + 2 * 8 * N_pad * 4
    budget = max(feat_budget - fixed, 1 << 18)

    if S <= s_chunk_cap:
        TS = S                              # single chunk (the real r3d_18 case)
    else:
        TS = max(sub, (s_chunk_cap // sub) * sub)

    def per_row(ts):
        ts_pad = _round_up(ts, sub)
        cost = 2 * 2 * ts_pad * C_pad * itemsize      # 2 streams x 2 buffers
        cost += 2 * N_pad * 4                         # output rows (2 buffers)
        if ts < S:
            cost += 2 * C_pad * 4                     # f32 stream accumulators
        return cost

    # Smallest batch tile that keeps the (TB, N) output block legal:
    # TB == B (any B) or TB a multiple of 8.
    min_rows = B if B <= 8 else 8
    # Shrink the S chunk (never overshoot the budget) until a legal tile fits.
    while per_row(TS) * min_rows > budget and TS > sub:
        TS = max(sub, ((TS // 2) // sub) * sub)

    rows = max(1, budget // per_row(TS))
    if rows >= B or B <= 8:
        TB = B
    else:
        TB = max(8, (rows // 8) * 8)

    # v7x (2 TensorCores): make sure the "parallel" batch axis has >= 2 tiles.
    if small_vmem and B > 8:
        TB = min(TB, 8 * max(1, (B // 2) // 8))
    # TODO(synk): for v7x with B <= 8 the batch axis cannot feed both cores;
    #             splitting the S axis across cores (per-core partial sums)
    #             is not implemented.

    return TB, TS


# --------------------------------------------------------------------------
# Wrapper
# --------------------------------------------------------------------------
def two_stream_avg_fuse(spacial_feat, temporal_feat, params, *,
                        channels_last=False, s_chunk_cap=1024,
                        feat_budget_bytes=None, vmem_limit_bytes=None):
    """Pooling + per-stream FC + average fusion on backbone feature maps.

    spacial_feat / temporal_feat:
      channels_last=False: module-native (B, C, T, H, W)
      channels_last=True : producer-emitted (B, T, H, W, C) (or (B, S, C))
    Native dtype (f32 or bf16) is kept end-to-end; the kernel accumulates in f32.
    """
    if spacial_feat.shape != temporal_feat.shape:
        raise ValueError("two streams must have matching feature shapes")

    if channels_last:
        # Recommended producer layout — no transpose, no extra HBM pass.
        B = int(spacial_feat.shape[0])
        C = int(spacial_feat.shape[-1])
        S = 1
        for d in spacial_feat.shape[1:-1]:
            S *= int(d)
        xs = spacial_feat.reshape(B, S, C)
        xt = temporal_feat.reshape(B, S, C)
    else:
        # Module-native (B, C, T, H, W).
        # TODO(synk): ideally the backbone emits channels-last features so this
        #             transpose (an extra HBM pass unless XLA fuses it into the
        #             producer) disappears; pass channels_last=True in that case.
        B, C = int(spacial_feat.shape[0]), int(spacial_feat.shape[1])
        S = 1
        for d in spacial_feat.shape[2:]:
            S *= int(d)
        xs = jnp.transpose(spacial_feat.reshape(B, C, S), (0, 2, 1))
        xt = jnp.transpose(temporal_feat.reshape(B, C, S), (0, 2, 1))

    itemsize = jnp.dtype(xs.dtype).itemsize

    # Fused head: PyTorch nn.Linear weight is (out, in); transpose and fold
    # both the 0.5 two-stream average and the 1/S pooling mean into the
    # weights; pre-average the biases.
    scale = 0.5 / float(S)
    ws = (scale * params["w_spacial"].T).astype(jnp.float32)       # (C, N)
    wt = (scale * params["w_temporal"].T).astype(jnp.float32)      # (C, N)
    N = int(ws.shape[1])
    bias = (0.5 * (params["b_spacial"] + params["b_temporal"])
            ).reshape(1, N).astype(jnp.float32)                    # (1, N)

    # Per-generation VMEM budget (v5e/v6e: 128 MiB physical; v7x: 64 MiB).
    try:
        vmem_cap = int(pltpu.get_tpu_info().vmem_capacity_bytes)
    except Exception:
        vmem_cap = 64 << 20                      # conservative (v7x-sized) fallback
    small_vmem = vmem_cap < (100 << 20)
    if feat_budget_bytes is None:
        feat_budget_bytes = (20 << 20) if small_vmem else (40 << 20)
    if vmem_limit_bytes is None:
        vmem_limit_bytes = (48 << 20) if small_vmem else (80 << 20)

    TB, TS = _plan_tiles(B, S, C, N, itemsize, feat_budget_bytes, small_vmem,
                         s_chunk_cap)
    n_bt = pl.cdiv(B, TB)
    multi = TS < S

    if not multi:
        grid = (n_bt,)
        in_specs = [
            pl.BlockSpec((TB, TS, C), lambda i: (i, 0, 0)),     # spacial feats
            pl.BlockSpec((TB, TS, C), lambda i: (i, 0, 0)),     # temporal feats
            pl.BlockSpec((C, N), lambda i: (0, 0)),             # fused W_spacial
            pl.BlockSpec((C, N), lambda i: (0, 0)),             # fused W_temporal
            pl.BlockSpec((1, N), lambda i: (0, 0)),             # fused bias
        ]
        out_spec = pl.BlockSpec((TB, N), lambda i: (i, 0))
        scratch = []
        kernel = _head_single_chunk_kernel
        dims = ("parallel",)
    else:
        grid = (n_bt, pl.cdiv(S, TS))
        in_specs = [
            pl.BlockSpec((TB, TS, C), lambda i, k: (i, k, 0)),
            pl.BlockSpec((TB, TS, C), lambda i, k: (i, k, 0)),
            pl.BlockSpec((C, N), lambda i, k: (0, 0)),
            pl.BlockSpec((C, N), lambda i, k: (0, 0)),
            pl.BlockSpec((1, N), lambda i, k: (0, 0)),
        ]
        out_spec = pl.BlockSpec((TB, N), lambda i, k: (i, 0))
        scratch = [pltpu.VMEM((TB, C), jnp.float32),
                   pltpu.VMEM((TB, C), jnp.float32)]
        kernel = functools.partial(_head_multi_chunk_kernel,
                                   S=S, TS=TS, needs_mask=(S % TS != 0))
        dims = ("parallel", "arbitrary")

    return pl.pallas_call(
        kernel,
        out_shape=jax.ShapeDtypeStruct((B, N), jnp.float32),
        grid_spec=pltpu.PrefetchScalarGridSpec(
            num_scalar_prefetch=0,
            grid=grid,
            in_specs=in_specs,
            out_specs=out_spec,
            scratch_shapes=scratch,
        ),
        compiler_params=pltpu.CompilerParams(
            dimension_semantics=dims,
            vmem_limit_bytes=vmem_limit_bytes,
        ),
    )(xs, xt, ws, wt, bias)


# --------------------------------------------------------------------------
# Pure-JAX reference (mirrors the PyTorch forward semantics)
# --------------------------------------------------------------------------
def reference_forward(spacial_feat, temporal_feat, params):
    B, C = spacial_feat.shape[:2]
    ps = jnp.mean(spacial_feat.reshape(B, C, -1).astype(jnp.float32), axis=-1)
    pt = jnp.mean(temporal_feat.reshape(B, C, -1).astype(jnp.float32), axis=-1)
    hp = jax.lax.Precision.HIGHEST
    ls = jnp.dot(ps, params["w_spacial"].T, precision=hp) + params["b_spacial"]
    lt = jnp.dot(pt, params["w_temporal"].T, precision=hp) + params["b_temporal"]
    stacked = jnp.stack([ls, lt], axis=1)            # (B, 2, num_classes)
    return jnp.mean(stacked, axis=1)                 # (B, num_classes)


if __name__ == "__main__":
    # Small shapes consistent with the module (real r3d_18 features: C=512,
    # S = T*H*W ~ 49-98).  C kept a multiple of 128 so the lane axis is dense,
    # as it is for the real backbone.
    B, C, T, H, W = 2, 128, 2, 4, 4
    num_classes = 8

    key = jax.random.PRNGKey(0)
    k_xs, k_xt, k_ws, k_bs, k_wt, k_bt = jax.random.split(key, 6)

    spacial_feat = jax.random.normal(k_xs, (B, C, T, H, W), dtype=jnp.float32)
    temporal_feat = jax.random.normal(k_xt, (B, C, T, H, W), dtype=jnp.float32)

    bound = 1.0 / (C ** 0.5)
    params = {
        "w_spacial": jax.random.uniform(k_ws, (num_classes, C), jnp.float32, -bound, bound),
        "b_spacial": jax.random.uniform(k_bs, (num_classes,), jnp.float32, -bound, bound),
        "w_temporal": jax.random.uniform(k_wt, (num_classes, C), jnp.float32, -bound, bound),
        "b_temporal": jax.random.uniform(k_bt, (num_classes,), jnp.float32, -bound, bound),
    }

    ref = reference_forward(spacial_feat, temporal_feat, params)

    # 1) Module-native (B, C, T, H, W) input, single-chunk fast path.
    out = two_stream_avg_fuse(spacial_feat, temporal_feat, params)
    out = jax.block_until_ready(out)
    assert out.shape == (B, num_classes)
    assert jnp.allclose(out, ref, atol=1e-5, rtol=1e-5), "mismatch (channels-first path)"

    # 2) Channels-last producer path (recommended layout, no transpose pass).
    xs_cl = jnp.transpose(spacial_feat, (0, 2, 3, 4, 1))
    xt_cl = jnp.transpose(temporal_feat, (0, 2, 3, 4, 1))
    out_cl = jax.block_until_ready(
        two_stream_avg_fuse(xs_cl, xt_cl, params, channels_last=True))
    assert jnp.allclose(out_cl, ref, atol=1e-5, rtol=1e-5), "mismatch (channels-last path)"

    # 3) Force the multi-chunk + ragged-mask path (covers the accumulator /
    #    pl.when structure used when S is too large for one chunk).
    out_mc = jax.block_until_ready(
        two_stream_avg_fuse(spacial_feat, temporal_feat, params, s_chunk_cap=24))
    assert jnp.allclose(out_mc, ref, atol=1e-5, rtol=1e-5), "mismatch (multi-chunk path)"

    print("KERNEL_OK")
</pallas_src>

<mosaic_0001>
module attributes {stable_mosaic.version = 11 : i64} {
  func.func @_head_single_chunk_kernel(%arg0: i32, %arg1: memref<2x32x128xf32, #tpu.memory_space<vmem>>, %arg2: memref<2x32x128xf32, #tpu.memory_space<vmem>>, %arg3: memref<128x8xf32, #tpu.memory_space<vmem>>, %arg4: memref<128x8xf32, #tpu.memory_space<vmem>>, %arg5: memref<1x8xf32, #tpu.memory_space<vmem>>, %arg6: memref<2x8xf32, #tpu.memory_space<vmem>>) attributes {dimension_semantics = [#tpu.dimension_semantics<parallel>], iteration_bounds = array<i64: 1>, scalar_prefetch = 0 : i64, scratch_operands = 0 : i64, tpu.core_type = #tpu.core_type<tc>, window_params = [{transform_indices = @transform_0, window_bounds = array<i64: 2, 32, 128>}, {transform_indices = @transform_1, window_bounds = array<i64: 2, 32, 128>}, {pipeline_mode = #tpu.pipeline_mode<synchronous>, transform_indices = @transform_2, window_bounds = array<i64: 128, 8>}, {pipeline_mode = #tpu.pipeline_mode<synchronous>, transform_indices = @transform_3, window_bounds = array<i64: 128, 8>}, {pipeline_mode = #tpu.pipeline_mode<synchronous>, transform_indices = @transform_4, window_bounds = array<i64: 1, 8>}, {transform_indices = @transform_5, window_bounds = array<i64: 2, 8>}]} {
    %c0 = arith.constant 0 : index
    %c0_0 = arith.constant 0 : index
    %c0_1 = arith.constant 0 : index
    %0 = vector.load %arg1[%c0, %c0_0, %c0_1] : memref<2x32x128xf32, #tpu.memory_space<vmem>>, vector<2x32x128xf32>
    %cst = arith.constant dense<0.000000e+00> : vector<2x128xf32>
    %1 = vector.multi_reduction <add>, %0, %cst [1] : vector<2x32x128xf32> to vector<2x128xf32>
    %c0_2 = arith.constant 0 : index
    %c0_3 = arith.constant 0 : index
    %c0_4 = arith.constant 0 : index
    %2 = vector.load %arg2[%c0_2, %c0_3, %c0_4] : memref<2x32x128xf32, #tpu.memory_space<vmem>>, vector<2x32x128xf32>
    %cst_5 = arith.constant dense<0.000000e+00> : vector<2x128xf32>
    %3 = vector.multi_reduction <add>, %2, %cst_5 [1] : vector<2x32x128xf32> to vector<2x128xf32>
    %c0_6 = arith.constant 0 : index
    %c0_7 = arith.constant 0 : index
    %4 = vector.load %arg3[%c0_6, %c0_7] : memref<128x8xf32, #tpu.memory_space<vmem>>, vector<128x8xf32>
    %cst_8 = arith.constant dense<0.000000e+00> : vector<2x8xf32>
    %5 = tpu.matmul %1, %4, %cst_8 {dimension_numbers = #tpu.dot_dimension_numbers<[1], [0], [0], [1], [0, 0, 1, 1], [], []>} : vector<2x128xf32>, vector<128x8xf32>, vector<2x8xf32> -> vector<2x8xf32>
    %c0_9 = arith.constant 0 : index
    %c0_10 = arith.constant 0 : index
    %6 = vector.load %arg4[%c0_9, %c0_10] : memref<128x8xf32, #tpu.memory_space<vmem>>, vector<128x8xf32>
    %cst_11 = arith.constant dense<0.000000e+00> : vector<2x8xf32>
    %7 = tpu.matmul %3, %6, %cst_11 {dimension_numbers = #tpu.dot_dimension_numbers<[1], [0], [0], [1], [0, 0, 1, 1], [], []>} : vector<2x128xf32>, vector<128x8xf32>, vector<2x8xf32> -> vector<2x8xf32>
    %8 = arith.addf %5, %7 : vector<2x8xf32>
    %c0_12 = arith.constant 0 : index
    %c0_13 = arith.constant 0 : index
    %9 = vector.load %arg5[%c0_12, %c0_13] : memref<1x8xf32, #tpu.memory_space<vmem>>, vector<1x8xf32>
    %10 = vector.broadcast %9 : vector<1x8xf32> to vector<2x8xf32>
    %11 = arith.addf %8, %10 : vector<2x8xf32>
    %c0_14 = arith.constant 0 : index
    %c0_15 = arith.constant 0 : index
    %12 = vector.load %arg6[%c0_14, %c0_15] : memref<2x8xf32, #tpu.memory_space<vmem>>, vector<2x8xf32>
    tpu.vector_store %arg6[%c0_14, %c0_15], %11 {strides = array<i32>} : memref<2x8xf32, #tpu.memory_space<vmem>>, vector<2x8xf32>,
    return
  }
  func.func @transform_0(%arg0: i32) -> (i32, i32, i32) {
    %c0_i32 = arith.constant 0 : i32
    %c0_i32_0 = arith.constant 0 : i32
    %c0_i32_1 = arith.constant 0 : i32
    return %arg0, %c0_i32, %c0_i32_0 : i32, i32, i32
  }
  func.func @transform_1(%arg0: i32) -> (i32, i32, i32) {
    %c0_i32 = arith.constant 0 : i32
    %c0_i32_0 = arith.constant 0 : i32
    %c0_i32_1 = arith.constant 0 : i32
    return %arg0, %c0_i32, %c0_i32_0 : i32, i32, i32
  }
  func.func @transform_2(%arg0: i32) -> (i32, i32) {
    %c0_i32 = arith.constant 0 : i32
    %c0_i32_0 = arith.constant 0 : i32
    %c0_i32_1 = arith.constant 0 : i32
    return %c0_i32, %c0_i32_0 : i32, i32
  }
  func.func @transform_3(%arg0: i32) -> (i32, i32) {
    %c0_i32 = arith.constant 0 : i32
    %c0_i32_0 = arith.constant 0 : i32
    %c0_i32_1 = arith.constant 0 : i32
    return %c0_i32, %c0_i32_0 : i32, i32
  }
  func.func @transform_4(%arg0: i32) -> (i32, i32) {
    %c0_i32 = arith.constant 0 : i32
    %c0_i32_0 = arith.constant 0 : i32
    %c0_i32_1 = arith.constant 0 : i32
    return %c0_i32, %c0_i32_0 : i32, i32
  }
  func.func @transform_5(%arg0: i32) -> (i32, i32) {
    %c0_i32 = arith.constant 0 : i32
    %c0_i32_0 = arith.constant 0 : i32
    return %arg0, %c0_i32 : i32, i32
  }
}

</mosaic_0001>

<llo_original>
// kernel: tpu_custom_call.1
$region0: #{tpu_custom_call.1}
  #allocation0 [shape = 'u32[]', space=smem, size = 0x4, offset = 0x4, fixed_abs, tag = 'smem constant byte address 0x4 - core index']
  #allocation1 [shape = 'u32[144,128]{1,0:T(1,128)}', space=vmem, size = 0x12000, scoped, tag = 'internal scratch']
  %s0 = inlined_call_operand.vmem [shape: f32[2,32,128], index: 0, kind: input, shape index: {}]
  %s1 = inlined_call_operand.vmem [shape: f32[2,32,128], index: 1, kind: input, shape index: {}]
  %s2 = inlined_call_operand.vmem [shape: f32[128,8], index: 2, kind: input, shape index: {}]
  %s3 = inlined_call_operand.vmem [shape: f32[128,8], index: 3, kind: input, shape index: {}]
  %s4 = inlined_call_operand.vmem [shape: f32[1,8], index: 4, kind: input, shape index: {}]
  %s5 = inlined_call_operand.hbm [shape: f32[2,8], index: 5, kind: output, shape index: {}]
  %s6 = sld [smem:[#allocation0]]
  $region30: #{tpu_custom_call.1} parent=0
    _
  %s8 = ssub.s32 1, %s6
  %s9 = scalar_select 0, %s8, %s6
  $region1: #{tpu_custom_call.1} parent=0
    #allocation2 [shape = 'u8[1024]{0}', space=vmem, size = 0x400, scoped, tag = 'output window, operand 0, single buffered']
    #allocation3 [shape = 's32[1]{0}', space=sflag, size = 0x4, scoped, tag = 'scoped memory for tpu_custom_call.1']
    %10 = vsyncpa [#allocation3], 0
    // Predicated region
    $region2: #{tpu_custom_call.1} parent=1 // pred_check
      _
    $region3: #{tpu_custom_call.1} parent=1 // pred_check_branch
      %12 = sbr.rel (0) target = $region5
    $region4: #{tpu_custom_call.1} parent=1 // pred_region
      _
    $region5: #{tpu_custom_call.1} parent=1 // pred_fallthru
      _
    // Predicated region
    $region6: #{tpu_custom_call.1} parent=1 // pred_check
      _
    $region7: #{tpu_custom_call.1} parent=1 // pred_check_branch
      %14 = sbr.rel (0) target = $region9
    $region8: #{tpu_custom_call.1} parent=1 // pred_region
      _
    $region9: #{tpu_custom_call.1} parent=1 // pred_fallthru
      _
    // Predicated region
    $region10: #{tpu_custom_call.1} parent=1 // pred_check
      _
    $region11: #{tpu_custom_call.1} parent=1 // pred_check_branch
      %16 = sbr.rel (0) target = $region13
    $region12: #{tpu_custom_call.1} parent=1 // pred_region
      _
    $region13: #{tpu_custom_call.1} parent=1 // pred_fallthru
      _
    // Predicated region
    $region14: #{tpu_custom_call.1} parent=1 // pred_check
      _
    $region15: #{tpu_custom_call.1} parent=1 // pred_check_branch
      %18 = sbr.rel (0) target = $region17
    $region16: #{tpu_custom_call.1} parent=1 // pred_region
      _
    $region17: #{tpu_custom_call.1} parent=1 // pred_fallthru
      _
    // Predicated region
    $region18: #{tpu_custom_call.1} parent=1 // pred_check
      _
    $region19: #{tpu_custom_call.1} parent=1 // pred_check_branch
      %20 = sbr.rel (0) target = $region21
    $region20: #{tpu_custom_call.1} parent=1 // pred_region
      _
    $region21: #{tpu_custom_call.1} parent=1 // pred_fallthru
      _
    %v21 = vld [vmem:[%s0] sm:$0xff]
    %v22 = vld [vmem:[%s0 + $0x8] sm:$0xff]
    %v23 = vld [vmem:[%s0 + $0x10] sm:$0xff]
    %v24 = vld [vmem:[%s0 + $0x18] sm:$0xff]
    %v25 = vld [vmem:[%s0 + $0x20] sm:$0xff]
    %v26 = vld [vmem:[%s0 + $0x28] sm:$0xff]
    %v27 = vld [vmem:[%s0 + $0x30] sm:$0xff]
    %v28 = vld [vmem:[%s0 + $0x38] sm:$0xff]
    %v29 = vadd.f32 %v21, %v22
    %v30 = vadd.f32 %v29, %v23
    %v31 = vadd.f32 %v30, %v24
    %v32 = vrot.slane %v31, 4
    %v33 = vadd.f32 %v31, %v32
    %v34 = vrot.slane %v33, 2
    %v35 = vadd.f32 %v33, %v34
    %v36 = vrot.slane %v35, 1
    %v37 = vadd.f32 %v35, %v36
    %v38 = vadd.f32 %v25, %v26
    %v39 = vadd.f32 %v38, %v27
    %v40 = vadd.f32 %v39, %v28
    %v41 = vrot.slane %v40, 4
    %v42 = vadd.f32 %v40, %v41
    %v43 = vrot.slane %v42, 2
    %v44 = vadd.f32 %v42, %v43
    %v45 = vrot.slane %v44, 1
    %v46 = vadd.f32 %v44, %v45
    %v47 = vld [vmem:[%s1] sm:$0xff]
    %v48 = vld [vmem:[%s1 + $0x8] sm:$0xff]
    %v49 = vld [vmem:[%s1 + $0x10] sm:$0xff]
    %v50 = vld [vmem:[%s1 + $0x18] sm:$0xff]
    %v51 = vld [vmem:[%s1 + $0x20] sm:$0xff]
    %v52 = vld [vmem:[%s1 + $0x28] sm:$0xff]
    %v53 = vld [vmem:[%s1 + $0x30] sm:$0xff]
    %v54 = vld [vmem:[%s1 + $0x38] sm:$0xff]
    %v55 = vadd.f32 %v47, %v48
    %v56 = vadd.f32 %v55, %v49
    %v57 = vadd.f32 %v56, %v50
    %v58 = vrot.slane %v57, 4
    %v59 = vadd.f32 %v57, %v58
    %v60 = vrot.slane %v59, 2
    %v61 = vadd.f32 %v59, %v60
    %v62 = vrot.slane %v61, 1
    %v63 = vadd.f32 %v61, %v62
    %v64 = vadd.f32 %v51, %v52
    %v65 = vadd.f32 %v64, %v53
    %v66 = vadd.f32 %v65, %v54
    %v67 = vrot.slane %v66, 4
    %v68 = vadd.f32 %v66, %v67
    %v69 = vrot.slane %v68, 2
    %v70 = vadd.f32 %v68, %v69
    %v71 = vrot.slane %v70, 1
    %v72 = vadd.f32 %v70, %v71
    %v73 = vld [vmem:[%s2] sm:$0xff]
    %v74 = vld [vmem:[%s2 + $0x8] sm:$0xff]
    %v75 = vld [vmem:[%s2 + $0x10] sm:$0xff]
    %v76 = vld [vmem:[%s2 + $0x18] sm:$0xff]
    %v77 = vld [vmem:[%s2 + $0x20] sm:$0xff]
    %v78 = vld [vmem:[%s2 + $0x28] sm:$0xff]
    %v79 = vld [vmem:[%s2 + $0x30] sm:$0xff]
    %v80 = vld [vmem:[%s2 + $0x38] sm:$0xff]
    %v81 = vld [vmem:[%s2 + $0x40] sm:$0xff]
    %v82 = vld [vmem:[%s2 + $0x48] sm:$0xff]
    %v83 = vld [vmem:[%s2 + $0x50] sm:$0xff]
    %v84 = vld [vmem:[%s2 + $0x58] sm:$0xff]
    %v85 = vld [vmem:[%s2 + $0x60] sm:$0xff]
    %v86 = vld [vmem:[%s2 + $0x68] sm:$0xff]
    %v87 = vld [vmem:[%s2 + $0x70] sm:$0xff]
    %v88 = vld [vmem:[%s2 + $0x78] sm:$0xff]
    %v89 = vld [vmem:[%s3] sm:$0xff]
    %v90 = vld [vmem:[%s3 + $0x8] sm:$0xff]
    %v91 = vld [vmem:[%s3 + $0x10] sm:$0xff]
    %v92 = vld [vmem:[%s3 + $0x18] sm:$0xff]
    %v93 = vld [vmem:[%s3 + $0x20] sm:$0xff]
    %v94 = vld [vmem:[%s3 + $0x28] sm:$0xff]
    %v95 = vld [vmem:[%s3 + $0x30] sm:$0xff]
    %v96 = vld [vmem:[%s3 + $0x38] sm:$0xff]
    %v97 = vld [vmem:[%s3 + $0x40] sm:$0xff]
    %v98 = vld [vmem:[%s3 + $0x48] sm:$0xff]
    %v99 = vld [vmem:[%s3 + $0x50] sm:$0xff]
    %v100 = vld [vmem:[%s3 + $0x58] sm:$0xff]
    %v101 = vld [vmem:[%s3 + $0x60] sm:$0xff]
    %v102 = vld [vmem:[%s3 + $0x68] sm:$0xff]
    %v103 = vld [vmem:[%s3 + $0x70] sm:$0xff]
    %v104 = vld [vmem:[%s3 + $0x78] sm:$0xff]
    %vm107 = vcmask 1041409
    %v108 = vsel %vm107, %v72, %v63
    %110 = vmatprep.subr.mxu0 0.0
    %111 = vmatpush1.msra.mxu0 %v89
    %112 = vmatprep.subr.mxu0 0.0
    %113 = vmatpush1.msra.mxu0 %v90
    %114 = vmatprep.subr.mxu0 0.0
    %115 = vmatpush1.msra.mxu0 %v91
    %116 = vmatprep.subr.mxu0 0.0
    %117 = vmatpush1.msra.mxu0 %v92
    %118 = vmatprep.subr.mxu0 0.0
    %119 = vmatpush1.msra.mxu0 %v93
    %120 = vmatprep.subr.mxu0 0.0
    %121 = vmatpush1.msra.mxu0 %v94
    %122 = vmatprep.subr.mxu0 0.0
    %123 = vmatpush1.msra.mxu0 %v95
    %124 = vmatprep.subr.mxu0 0.0
    %125 = vmatpush1.msra.mxu0 %v96
    %126 = vmatprep.subr.mxu0 0.0
    %127 = vmatpush1.msra.mxu0 %v97
    %128 = vmatprep.subr.mxu0 0.0
    %129 = vmatpush1.msra.mxu0 %v98
    %130 = vmatprep.subr.mxu0 0.0
    %131 = vmatpush1.msra.mxu0 %v99
    %132 = vmatprep.subr.mxu0 0.0
    %133 = vmatpush1.msra.mxu0 %v100
    %134 = vmatprep.subr.mxu0 0.0
    %135 = vmatpush1.msra.mxu0 %v101
    %136 = vmatprep.subr.mxu0 0.0
    %137 = vmatpush1.msra.mxu0 %v102
    %138 = vmatprep.subr.mxu0 0.0
    %139 = vmatpush1.msra.mxu0 %v103
    %140 = vmatprep.subr.mxu0 0.0
    %141 = vmatpush1.msra.mxu0 %v104
    %142 = vmatprep.subr.mxu0 0.0
    %143 = vmatpush1.msra.mxu0 0.0
    %144 = vmatprep.subr.mxu0 0.0
    %145 = vmatpush1.msra.mxu0 0.0
    %146 = vmatprep.subr.mxu0 0.0
    %147 = vmatpush1.msra.mxu0 0.0
    %148 = vmatprep.subr.mxu0 0.0
    %149 = vmatpush1.msra.mxu0 0.0
    %150 = vmatprep.subr.mxu0 0.0
    %151 = vmatpush1.msra.mxu0 0.0
    %152 = vmatprep.subr.mxu0 0.0
    %153 = vmatpush1.msra.mxu0 0.0
    %154 = vmatprep.subr.mxu0 0.0
    %155 = vmatpush1.msra.mxu0 0.0
    %156 = vmatprep.subr.mxu0 0.0
    %157 = vmatpush1.msra.mxu0 0.0
    %158 = vmatprep.subr.mxu0 0.0
    %159 = vmatpush1.msra.mxu0 0.0
    %160 = vmatprep.subr.mxu0 0.0
    %161 = vmatpush1.msra.mxu0 0.0
    %162 = vmatprep.subr.mxu0 0.0
    %163 = vmatpush1.msra.mxu0 0.0
    %164 = vmatprep.subr.mxu0 0.0
    %165 = vmatpush1.msra.mxu0 0.0
    %166 = vmatprep.subr.mxu0 0.0
    %167 = vmatpush1.msra.mxu0 0.0
    %168 = vmatprep.subr.mxu0 0.0
    %169 = vmatpush1.msra.mxu0 0.0
    %170 = vmatprep.subr.mxu0 0.0
    %171 = vmatpush1.msra.mxu0 0.0
    %172 = vmatprep.subr.mxu0 0.0
    %173 = vmatpush1.msra.mxu0 0.0
    %174 = vmatprep.mubr.f32.mxu0 0.0
    %175 = vmatmul.mubr.f32.gmra.mrb[0].mxu0 %v108
    %v176 = vpop.f32.mrb[0].mxu0
    %v177 = vadd.f32 0.0, %v176
    %v178 = vpop.f32.mrb[0].mxu0
    %179 = vdwg.mxu0
    %v182 = vsel %vm107, %v46, %v37
    %184 = vmatprep.subr.mxu0 0.0
    %185 = vmatpush1.msra.mxu0 %v73
    %186 = vmatprep.subr.mxu0 0.0
    %187 = vmatpush1.msra.mxu0 %v74
    %188 = vmatprep.subr.mxu0 0.0
    %189 = vmatpush1.msra.mxu0 %v75
    %190 = vmatprep.subr.mxu0 0.0
    %191 = vmatpush1.msra.mxu0 %v76
    %192 = vmatprep.subr.mxu0 0.0
    %193 = vmatpush1.msra.mxu0 %v77
    %194 = vmatprep.subr.mxu0 0.0
    %195 = vmatpush1.msra.mxu0 %v78
    %196 = vmatprep.subr.mxu0 0.0
    %197 = vmatpush1.msra.mxu0 %v79
    %198 = vmatprep.subr.mxu0 0.0
    %199 = vmatpush1.msra.mxu0 %v80
    %200 = vmatprep.subr.mxu0 0.0
    %201 = vmatpush1.msra.mxu0 %v81
    %202 = vmatprep.subr.mxu0 0.0
    %203 = vmatpush1.msra.mxu0 %v82
    %204 = vmatprep.subr.mxu0 0.0
    %205 = vmatpush1.msra.mxu0 %v83
    %206 = vmatprep.subr.mxu0 0.0
    %207 = vmatpush1.msra.mxu0 %v84
    %208 = vmatprep.subr.mxu0 0.0
    %209 = vmatpush1.msra.mxu0 %v85
    %210 = vmatprep.subr.mxu0 0.0
    %211 = vmatpush1.msra.mxu0 %v86
    %212 = vmatprep.subr.mxu0 0.0
    %213 = vmatpush1.msra.mxu0 %v87
    %214 = vmatprep.subr.mxu0 0.0
    %215 = vmatpush1.msra.mxu0 %v88
    %216 = vmatprep.subr.mxu0 0.0
    %217 = vmatpush1.msra.mxu0 0.0
    %218 = vmatprep.subr.mxu0 0.0
    %219 = vmatpush1.msra.mxu0 0.0
    %220 = vmatprep.subr.mxu0 0.0
    %221 = vmatpush1.msra.mxu0 0.0
    %222 = vmatprep.subr.mxu0 0.0
    %223 = vmatpush1.msra.mxu0 0.0
    %224 = vmatprep.subr.mxu0 0.0
    %225 = vmatpush1.msra.mxu0 0.0
    %226 = vmatprep.subr.mxu0 0.0
    %227 = vmatpush1.msra.mxu0 0.0
    %228 = vmatprep.subr.mxu0 0.0
    %229 = vmatpush1.msra.mxu0 0.0
    %230 = vmatprep.subr.mxu0 0.0
    %231 = vmatpush1.msra.mxu0 0.0
    %232 = vmatprep.subr.mxu0 0.0
    %233 = vmatpush1.msra.mxu0 0.0
    %234 = vmatprep.subr.mxu0 0.0
    %235 = vmatpush1.msra.mxu0 0.0
    %236 = vmatprep.subr.mxu0 0.0
    %237 = vmatpush1.msra.mxu0 0.0
    %238 = vmatprep.subr.mxu0 0.0
    %239 = vmatpush1.msra.mxu0 0.0
    %240 = vmatprep.subr.mxu0 0.0
    %241 = vmatpush1.msra.mxu0 0.0
    %242 = vmatprep.subr.mxu0 0.0
    %243 = vmatpush1.msra.mxu0 0.0
    %244 = vmatprep.subr.mxu0 0.0
    %245 = vmatpush1.msra.mxu0 0.0
    %246 = vmatprep.subr.mxu0 0.0
    %247 = vmatpush1.msra.mxu0 0.0
    %248 = vmatprep.mubr.f32.mxu0 0.0
    %249 = vmatmul.mubr.f32.gmra.mrb[0].mxu0 %v182
    %v250 = vpop.f32.mrb[0].mxu0
    %v251 = vadd.f32 %v177, %v250
    %v252 = vpop.f32.mrb[0].mxu0
    %253 = vdwg.mxu0
    %v254 = vld [vmem:[%s4] sm:$0x1]
    %v256 = vlaneseq
    %v257 = vshrl.u32 %v256, 7
    %v258 = vsub.s32 0, %v257
    %v259 = vrot.slane %v254, %v258
    %v261 = vadd.f32 %v251, %v259
    %vm262 = vcmask 58368
    %263 = vst.msk [vmem:[#allocation2] sm:$0x3] %vm262, %v261
    // Predicated region
    $region22: #{tpu_custom_call.1} parent=1 // pred_check
      _
    $region23: #{tpu_custom_call.1} parent=1 // pred_check_branch
      %265 = sbr.rel (0) target = $region25
    $region24: #{tpu_custom_call.1} parent=1 // pred_region
      %s267 = ssub.s32 32, 32
      %268 = vsyncadd [#allocation3], %s267
      %s270 = sshll.u32 [#allocation2], 4
      %s271 = int_to_ptr.vmem [resolvable:$true] %s270
      %273 = dma.vmem_to_hbm [thread:$0]  %s271, 32, %s5, [#allocation3]
    $region25: #{tpu_custom_call.1} parent=1 // pred_fallthru
      _
    // Predicated region
    $region26: #{tpu_custom_call.1} parent=1 // pred_check
      _
    $region27: #{tpu_custom_call.1} parent=1 // pred_check_branch
      %275 = sbr.rel (0) target = $region29
    $region28: #{tpu_custom_call.1} parent=1 // pred_region
      %276 = dma.done [#allocation3], 32
    $region29: #{tpu_custom_call.1} parent=1 // pred_fallthru
      _
    %277 = vsyncpa [#allocation3], 1

</llo_original>
